<compile_context>
chip_gen: v5e
topology: v5e:2x2
jax: 0.10.0
libtpu: 0.0.40
codegen_flags: <defaults>
</compile_context>

<pallas_src>
import math

import jax
import jax.numpy as jnp
from jax.experimental import pallas as pl
from jax.experimental.pallas import tpu as pltpu

LN_10000 = math.log(10000.0)


# ----------------------------- Pallas kernel -----------------------------

def _add_pe_kernel(x_ref, pe_ref, o_ref):
    # x_ref/o_ref: (tb, tc) block of the flattened (B, T*D) activations.
    # pe_ref:      (1,  tc) batch-invariant PE row -> free sublane broadcast.
    o_ref[...] = (x_ref[...] + pe_ref[...]).astype(o_ref.dtype)


# ------------------------- PE table (== module __init__) -------------------------

def make_pe_table(seq_len, dmodel, dtype=jnp.float32):
    """Sinusoidal PE table of shape (seq_len, dmodel).

    Uses a single phase-shifted sine: PE(pos, d) = sin(pos * inv_freq(d) + (pi/2)*(d odd)),
    which equals sin(...) for even d and cos(...) for odd d.
    """
    pos = jnp.arange(seq_len, dtype=jnp.float32)[:, None]            # (T, 1)
    d = jnp.arange(dmodel, dtype=jnp.int32)[None, :]                  # (1, D)
    two_i = ((d // 2) * 2).astype(jnp.float32)
    inv_freq = jnp.exp(two_i * (-LN_10000 / dmodel))                  # 1/10000^(2i/D)
    angle = pos * inv_freq + (math.pi / 2.0) * (d % 2).astype(jnp.float32)
    return jnp.sin(angle).astype(dtype)


# ----------------------------- Tiling helpers -----------------------------

def _pick_col_tile(c):
    # Lane-dense tile: multiple of 128, at most 1024 lanes.
    for t in (1024, 512, 384, 256, 128):
        if c % t == 0:
            return t
    return c            # full extent (allowed when it equals the array dim)


def _pick_row_tile(b, tc, itemsize):
    # Keep per-array block footprint <= ~2 MiB; rows a multiple of 8 when possible.
    budget = 2 * 1024 * 1024
    for t in (512, 256, 128, 64, 32, 16, 8):
        if b % t == 0 and t * tc * itemsize <= budget:
            return t
    return b            # full extent (small / odd batch sizes)


# ----------------------------- Wrapper -----------------------------

def position_encoder(x, pe=None):
    """x: (B, T, D) -> x + sinusoidal positional encoding (dropout = identity)."""
    B, T, D = x.shape
    C = T * D
    if pe is None:
        pe = make_pe_table(T, D, x.dtype)
    x2d = x.reshape(B, C)                       # free reshape; lane-dense last dim
    pe2d = pe.reshape(1, C).astype(x.dtype)

    itemsize = jnp.dtype(x.dtype).itemsize
    tc = _pick_col_tile(C)
    tb = _pick_row_tile(B, tc, itemsize)
    # Column blocks on the OUTER grid axis, batch on the inner axis, so the
    # PE block index (0, c) is constant across the inner loop and the PE tile
    # stays resident in VMEM (no re-fetch per batch block).
    grid = (C // tc, B // tb)

    out2d = pl.pallas_call(
        _add_pe_kernel,
        out_shape=jax.ShapeDtypeStruct((B, C), x.dtype),
        grid_spec=pltpu.PrefetchScalarGridSpec(
            num_scalar_prefetch=0,
            grid=grid,
            in_specs=[
                pl.BlockSpec((tb, tc), lambda c, b: (b, c)),   # x
                pl.BlockSpec((1, tc), lambda c, b: (0, c)),    # PE row (batch-invariant)
            ],
            out_specs=pl.BlockSpec((tb, tc), lambda c, b: (b, c)),
        ),
        compiler_params=pltpu.CompilerParams(
            dimension_semantics=("parallel", "parallel")),
        cost_estimate=pl.CostEstimate(
            flops=B * C,
            transcendentals=0,
            bytes_accessed=(2 * B * C + C) * itemsize),
    )(x2d, pe2d)
    return out2d.reshape(B, T, D)


# ----------------------------- Pure-JAX reference -----------------------------

def position_encoder_ref(x):
    # Independent formula (explicit sin/cos select) for cross-checking.
    B, T, D = x.shape
    pos = jnp.arange(T, dtype=jnp.float32)[:, None]            # (T, 1)
    d = jnp.arange(D, dtype=jnp.int32)[None, :]                 # (1, D)
    two_i = ((d // 2) * 2).astype(jnp.float32)
    angle = pos / jnp.power(10000.0, two_i / D)
    pe = jnp.where((d % 2) == 0, jnp.sin(angle), jnp.cos(angle))
    return x + pe[None, :, :].astype(x.dtype)


# ----------------------------- Main -----------------------------

if __name__ == "__main__":
    B, SEQ_LEN, D_MODEL = 2, 8, 32

    key = jax.random.PRNGKey(0)
    x = jax.random.normal(key, (B, SEQ_LEN, D_MODEL), jnp.float32)

    out = jax.block_until_ready(position_encoder(x))
    ref = position_encoder_ref(x)

    assert out.shape == (B, SEQ_LEN, D_MODEL)
    assert bool(jnp.all(jnp.isfinite(out)))
    assert bool(jnp.allclose(out, ref, atol=1e-5, rtol=1e-5)), (
        "Pallas output does not match reference")
    print("KERNEL_OK")
</pallas_src>

<mosaic_0001>
module attributes {stable_mosaic.version = 11 : i64} {
  func.func @_add_pe_kernel(%arg0: i32, %arg1: i32, %arg2: memref<2x256xf32, #tpu.memory_space<vmem>>, %arg3: memref<1x256xf32, #tpu.memory_space<vmem>>, %arg4: memref<2x256xf32, #tpu.memory_space<vmem>>) attributes {dimension_semantics = [#tpu.dimension_semantics<parallel>, #tpu.dimension_semantics<parallel>], iteration_bounds = array<i64: 1, 1>, scalar_prefetch = 0 : i64, scratch_operands = 0 : i64, tpu.core_type = #tpu.core_type<tc>, window_params = [{transform_indices = @transform_0, window_bounds = array<i64: 2, 256>}, {transform_indices = @transform_1, window_bounds = array<i64: 1, 256>}, {transform_indices = @transform_2, window_bounds = array<i64: 2, 256>}]} {
    %c0 = arith.constant 0 : index
    %c0_0 = arith.constant 0 : index
    %0 = vector.load %arg2[%c0, %c0_0] : memref<2x256xf32, #tpu.memory_space<vmem>>, vector<2x256xf32>
    %c0_1 = arith.constant 0 : index
    %c0_2 = arith.constant 0 : index
    %1 = vector.load %arg3[%c0_1, %c0_2] : memref<1x256xf32, #tpu.memory_space<vmem>>, vector<1x256xf32>
    %2 = vector.broadcast %1 : vector<1x256xf32> to vector<2x256xf32>
    %3 = arith.addf %0, %2 : vector<2x256xf32>
    %c0_3 = arith.constant 0 : index
    %c0_4 = arith.constant 0 : index
    %4 = vector.load %arg4[%c0_3, %c0_4] : memref<2x256xf32, #tpu.memory_space<vmem>>, vector<2x256xf32>
    tpu.vector_store %arg4[%c0_3, %c0_4], %3 {strides = array<i32>} : memref<2x256xf32, #tpu.memory_space<vmem>>, vector<2x256xf32>,
    return
  }
  func.func @transform_0(%arg0: i32, %arg1: i32) -> (i32, i32) {
    %c0_i32 = arith.constant 0 : i32
    return %arg1, %arg0 : i32, i32
  }
  func.func @transform_1(%arg0: i32, %arg1: i32) -> (i32, i32) {
    %c0_i32 = arith.constant 0 : i32
    %c0_i32_0 = arith.constant 0 : i32
    return %c0_i32, %arg0 : i32, i32
  }
  func.func @transform_2(%arg0: i32, %arg1: i32) -> (i32, i32) {
    %c0_i32 = arith.constant 0 : i32
    return %arg1, %arg0 : i32, i32
  }
}

</mosaic_0001>

<llo_original>
// kernel: tpu_custom_call.1
$region0: #{tpu_custom_call.1}
  #allocation0 [shape = 'u32[]', space=smem, size = 0x4, offset = 0x4, fixed_abs, tag = 'smem constant byte address 0x4 - core index']
  #allocation1 [shape = 'u32[72,128]{1,0:T(1,128)}', space=vmem, size = 0x9000, scoped, tag = 'internal scratch']
  %s0 = inlined_call_operand.hbm [shape: f32[2,256], index: 0, kind: input, shape index: {}]
  %s1 = inlined_call_operand.hbm [shape: f32[1,256], index: 1, kind: input, shape index: {}]
  %s2 = inlined_call_operand.hbm [shape: f32[2,256], index: 2, kind: output, shape index: {}]
  %s3 = sld [smem:[#allocation0]]
  $region26: #{tpu_custom_call.1} parent=0
    _
  %s5 = ssub.s32 1, %s3
  %s6 = scalar_select 0, %s5, %s3
  $region1: #{tpu_custom_call.1} parent=0
    #allocation2 [shape = 'u8[2048]{0}', space=vmem, size = 0x800, scoped, tag = 'input window, operand 0, single buffered']
    #allocation3 [shape = 's32[1]{0}', space=sflag, size = 0x4, scoped, tag = 'scoped memory for tpu_custom_call.1']
    #allocation4 [shape = 's32[1]{0}', space=sflag, size = 0x4, scoped, tag = 'scoped memory for tpu_custom_call.1']
    #allocation5 [shape = 'u8[1024]{0}', space=vmem, size = 0x400, scoped, tag = 'input window, operand 1, single buffered']
    #allocation6 [shape = 's32[1]{0}', space=sflag, size = 0x4, scoped, tag = 'scoped memory for tpu_custom_call.1']
    #allocation7 [shape = 'u8[2048]{0}', space=vmem, size = 0x800, scoped, tag = 'output window, operand 0, single buffered']
    %7 = vsyncpa [#allocation3], 0
    %8 = vsyncpa [#allocation6], 0
    %9 = vsyncpa [#allocation4], 0
    // Predicated region
    $region2: #{tpu_custom_call.1} parent=1 // pred_check
      _
    $region3: #{tpu_custom_call.1} parent=1 // pred_check_branch
      %11 = sbr.rel (0) target = $region5
    $region4: #{tpu_custom_call.1} parent=1 // pred_region
      %13 = vsyncadd [#allocation3], 0
      %s15 = sshll.u32 %s0, 4
      %s16 = int_to_ptr.hbm [resolvable:$true] %s15
      %s17 = sshll.u32 [#allocation2], 4
      %s18 = int_to_ptr.vmem [resolvable:$true] %s17
      %20 = dma.hbm_to_vmem [thread:$0]  %s16, 64, %s18, [#allocation3]
    $region5: #{tpu_custom_call.1} parent=1 // pred_fallthru
      _
    // Predicated region
    $region6: #{tpu_custom_call.1} parent=1 // pred_check
      _
    $region7: #{tpu_custom_call.1} parent=1 // pred_check_branch
      %22 = sbr.rel (0) target = $region9
    $region8: #{tpu_custom_call.1} parent=1 // pred_region
      %24 = vsyncadd [#allocation6], 0
      %s26 = sshll.u32 %s1, 4
      %s27 = int_to_ptr.hbm [resolvable:$true] %s26
      %s28 = sshll.u32 [#allocation5], 4
      %s29 = int_to_ptr.vmem [resolvable:$true] %s28
      %31 = dma.hbm_to_vmem [thread:$0]  %s27, 32, %s29, [#allocation6]
    $region9: #{tpu_custom_call.1} parent=1 // pred_fallthru
      _
    // Predicated region
    $region10: #{tpu_custom_call.1} parent=1 // pred_check
      _
    $region11: #{tpu_custom_call.1} parent=1 // pred_check_branch
      %33 = sbr.rel (0) target = $region13
    $region12: #{tpu_custom_call.1} parent=1 // pred_region
      %35 = dma.done [#allocation3], 64
    $region13: #{tpu_custom_call.1} parent=1 // pred_fallthru
      _
    // Predicated region
    $region14: #{tpu_custom_call.1} parent=1 // pred_check
      _
    $region15: #{tpu_custom_call.1} parent=1 // pred_check_branch
      %37 = sbr.rel (0) target = $region17
    $region16: #{tpu_custom_call.1} parent=1 // pred_region
      %39 = dma.done [#allocation6], 32
    $region17: #{tpu_custom_call.1} parent=1 // pred_fallthru
      _
    %v40 = vld [vmem:[#allocation2] sm:$0xf]
    %v41 = vld [vmem:[#allocation5] sm:$0x3]
    %v43 = vperm.slane %v41, 0
    %v44 = vperm.slane %v41, 1
    %v45 = vrot.slane %v44, 6
    %vm46 = vcmask 1041408
    %v47 = vsel %vm46, %v43, %v45
    %v49 = vadd.f32 %v40, %v47
    %50 = vst [vmem:[#allocation7] sm:$0xf] %v49
    // Predicated region
    $region18: #{tpu_custom_call.1} parent=1 // pred_check
      _
    $region19: #{tpu_custom_call.1} parent=1 // pred_check_branch
      %52 = sbr.rel (0) target = $region21
    $region20: #{tpu_custom_call.1} parent=1 // pred_region
      %54 = vsyncadd [#allocation4], 0
      %s56 = sshll.u32 [#allocation7], 4
      %s57 = int_to_ptr.vmem [resolvable:$true] %s56
      %s58 = sshll.u32 %s2, 4
      %s59 = int_to_ptr.hbm [resolvable:$true] %s58
      %61 = dma.vmem_to_hbm [thread:$0]  %s57, 64, %s59, [#allocation4]
    $region21: #{tpu_custom_call.1} parent=1 // pred_fallthru
      _
    // Predicated region
    $region22: #{tpu_custom_call.1} parent=1 // pred_check
      _
    $region23: #{tpu_custom_call.1} parent=1 // pred_check_branch
      %63 = sbr.rel (0) target = $region25
    $region24: #{tpu_custom_call.1} parent=1 // pred_region
      %65 = dma.done [#allocation4], 64
    $region25: #{tpu_custom_call.1} parent=1 // pred_fallthru
      _
    %66 = vsyncpa [#allocation3], 1
    %67 = vsyncpa [#allocation6], 1
    %68 = vsyncpa [#allocation4], 1

</llo_original>
